<compile_context>
chip_gen: v5e
topology: v5e:2x2
jax: 0.10.0
libtpu: 0.0.40
codegen_flags: <defaults>
</compile_context>

<pallas_src>
import functools

import jax
import jax.numpy as jnp
from jax.experimental import pallas as pl
from jax.experimental.pallas import tpu as pltpu

LANE = 128
SUBLANE = 8
MAX_BB = 4096  # double-buffered VMEM at this tile is ~12-14 MiB, < 32 MiB scoped limit


def _round_up(n, m):
    return (n + m - 1) // m * m


def mlp_kernel(x_ref, w1_ref, b1_ref, w2_ref, b2_ref, w3_ref, b3_ref,
               w4_ref, b4_ref, o_ref):
    """Fused Linear->ReLU x3 -> Linear on one [bb, in_dim] batch tile.
    Weights are VMEM-resident (same block every grid step)."""
    cdt = w1_ref.dtype                       # MXU operand dtype (bf16 default, f32 for checks)
    x = x_ref[...].astype(cdt)               # in-kernel cast: rides free VALU slack
    h = jnp.dot(x, w1_ref[...], preferred_element_type=jnp.float32)
    h = jnp.maximum(h + b1_ref[...], 0.0)
    h = jnp.dot(h.astype(cdt), w2_ref[...], preferred_element_type=jnp.float32)
    h = jnp.maximum(h + b2_ref[...], 0.0)
    h = jnp.dot(h.astype(cdt), w3_ref[...], preferred_element_type=jnp.float32)
    h = jnp.maximum(h + b3_ref[...], 0.0)
    out = jnp.dot(h.astype(cdt), w4_ref[...], preferred_element_type=jnp.float32)
    o_ref[...] = (out + b4_ref[...]).astype(o_ref.dtype)


def pack_params(params, compute_dtype=jnp.bfloat16):
    """One-time packing: weights -> compute dtype (bf16 production path),
    biases -> f32. Do this once, outside the per-call hot path."""
    packed = {}
    for i in (1, 2, 3, 4):
        packed[f"w{i}"] = jnp.asarray(params[f"w{i}"], compute_dtype)
        packed[f"b{i}"] = jnp.asarray(params[f"b{i}"], jnp.float32)
    return packed


@functools.partial(jax.jit, static_argnames=("block_b",))
def mlp_forward(x, packed, block_b=2048):
    """x: [B, in_dim] f32 (unpadded). packed: output of pack_params()."""
    B, in_dim = x.shape
    hidden = packed["w1"].shape[1]
    out_dim = packed["w4"].shape[1]
    assert block_b % SUBLANE == 0

    # Batch tile: large enough to amortize the ~0.35us/step pipeline overhead,
    # but capped so grid >= 2 (both v7x TensorCores get work) and VMEM stays
    # comfortably under the scoped limit. Ragged final blocks are handled by
    # Pallas edge masking -> no zero-padding of B, no extra HBM pass over x.
    bb = min(block_b, _round_up(-(-B // 2), SUBLANE), MAX_BB)
    bb = max(bb, SUBLANE)
    grid = (pl.cdiv(B, bb),)

    def rep(shape):
        # Weights/biases: same block every grid step (stay resident in VMEM).
        return pl.BlockSpec(shape, lambda i: (0,) * len(shape))

    w_bytes = sum(packed[f"w{i}"].size * packed[f"w{i}"].dtype.itemsize
                  for i in (1, 2, 3, 4))
    b_bytes = sum(packed[f"b{i}"].size * 4 for i in (1, 2, 3, 4))
    flops = 2 * B * (in_dim * hidden + 2 * hidden * hidden + hidden * out_dim)
    bytes_accessed = int(x.size * x.dtype.itemsize + w_bytes + b_bytes
                         + B * out_dim * 4)

    return pl.pallas_call(
        mlp_kernel,
        out_shape=jax.ShapeDtypeStruct((B, out_dim), jnp.float32),
        grid_spec=pltpu.PrefetchScalarGridSpec(
            num_scalar_prefetch=0,
            grid=grid,
            in_specs=[
                pl.BlockSpec((bb, in_dim), lambda i: (i, 0)),  # x tile, unpadded f32
                rep((in_dim, hidden)),    # w1 (full-array last dim -> no lane pad needed)
                rep((1, hidden)),         # b1
                rep((hidden, hidden)),    # w2
                rep((1, hidden)),         # b2
                rep((hidden, hidden)),    # w3
                rep((1, hidden)),         # b3
                rep((hidden, out_dim)),   # w4, unpadded
                rep((1, out_dim)),        # b4, unpadded
            ],
            out_specs=pl.BlockSpec((bb, out_dim), lambda i: (i, 0)),
        ),
        compiler_params=pltpu.CompilerParams(
            dimension_semantics=("parallel",),
            vmem_limit_bytes=32 * 1024 * 1024),
        cost_estimate=pl.CostEstimate(
            flops=flops, transcendentals=0, bytes_accessed=bytes_accessed),
    )(x, packed["w1"], packed["b1"], packed["w2"], packed["b2"],
      packed["w3"], packed["b3"], packed["w4"], packed["b4"])


def init_mlp_params(key, in_dim, out_dim, hidden=128, dtype=jnp.float32):
    """Deterministic init mirroring nn.Linear: U(-1/sqrt(fan_in), 1/sqrt(fan_in)).
    Weights are stored pre-transposed as [fan_in, fan_out]."""
    dims = [(in_dim, hidden), (hidden, hidden), (hidden, hidden), (hidden, out_dim)]
    params = {}
    for idx, (fi, fo) in enumerate(dims, start=1):
        key, kw, kb = jax.random.split(key, 3)
        bound = 1.0 / (fi ** 0.5)
        params[f"w{idx}"] = jax.random.uniform(kw, (fi, fo), dtype, -bound, bound)
        params[f"b{idx}"] = jax.random.uniform(kb, (1, fo), dtype, -bound, bound)
    return params


def mlp_reference(x, params):
    """Pure-f32 reference matching PyTorch MLP.forward."""
    h = jnp.maximum(x @ params["w1"] + params["b1"], 0.0)
    h = jnp.maximum(h @ params["w2"] + params["b2"], 0.0)
    h = jnp.maximum(h @ params["w3"] + params["b3"], 0.0)
    return h @ params["w4"] + params["b4"]


def mlp_reference_quantized(x, params, compute_dtype):
    """Reference using the same bf16-operand / f32-accumulate scheme as the kernel."""
    def lin(h, w, b):
        return jnp.dot(h.astype(compute_dtype), w.astype(compute_dtype),
                       preferred_element_type=jnp.float32) + b
    h = jnp.maximum(lin(x, params["w1"], params["b1"]), 0.0)
    h = jnp.maximum(lin(h, params["w2"], params["b2"]), 0.0)
    h = jnp.maximum(lin(h, params["w3"], params["b3"]), 0.0)
    return lin(h, params["w4"], params["b4"])


if __name__ == "__main__":
    key = jax.random.PRNGKey(0)
    k_x, k_p, k_x2 = jax.random.split(key, 3)

    in_dim, out_dim = 64, 32
    params = init_mlp_params(k_p, in_dim, out_dim)

    # 1) Production bf16-operand / f32-accumulate path. Params packed once;
    #    B=512 with the grid>=2 rule gives bb=256, grid=2 (both v7x cores busy).
    packed_bf16 = pack_params(params, jnp.bfloat16)
    B = 512
    x = jax.random.normal(k_x, (B, in_dim), jnp.float32)
    out = jax.block_until_ready(mlp_forward(x, packed_bf16))
    ref_q = mlp_reference_quantized(x, params, jnp.bfloat16)
    assert out.shape == (B, out_dim)
    assert jnp.allclose(out, ref_q, atol=5e-3, rtol=5e-3), \
        float(jnp.max(jnp.abs(out - ref_q)))

    # 2) f32-operand verification path on a ragged batch (B=200 -> bb=104,
    #    grid=2 with a partially-valid final block: exercises edge masking)
    #    against the exact PyTorch-semantics f32 reference.
    packed_f32 = pack_params(params, jnp.float32)
    B2 = 200
    x2 = jax.random.normal(k_x2, (B2, in_dim), jnp.float32)
    out2 = jax.block_until_ready(mlp_forward(x2, packed_f32, block_b=128))
    ref2 = mlp_reference(x2, params)
    assert out2.shape == (B2, out_dim)
    assert jnp.allclose(out2, ref2, atol=1e-3, rtol=1e-3), \
        float(jnp.max(jnp.abs(out2 - ref2)))

    print("KERNEL_OK")
</pallas_src>

<mosaic_0001>
module attributes {stable_mosaic.version = 11 : i64} {
  func.func @mlp_kernel(%arg0: i32, %arg1: memref<256x64xf32, #tpu.memory_space<vmem>>, %arg2: memref<64x128xbf16, #tpu.memory_space<vmem>>, %arg3: memref<1x128xf32, #tpu.memory_space<vmem>>, %arg4: memref<128x128xbf16, #tpu.memory_space<vmem>>, %arg5: memref<1x128xf32, #tpu.memory_space<vmem>>, %arg6: memref<128x128xbf16, #tpu.memory_space<vmem>>, %arg7: memref<1x128xf32, #tpu.memory_space<vmem>>, %arg8: memref<128x32xbf16, #tpu.memory_space<vmem>>, %arg9: memref<1x32xf32, #tpu.memory_space<vmem>>, %arg10: memref<256x32xf32, #tpu.memory_space<vmem>>) attributes {dimension_semantics = [#tpu.dimension_semantics<parallel>], iteration_bounds = array<i64: 2>, scalar_prefetch = 0 : i64, scratch_operands = 0 : i64, tpu.core_type = #tpu.core_type<tc>, window_params = [{transform_indices = @transform_0, window_bounds = array<i64: 256, 64>}, {pipeline_mode = #tpu.pipeline_mode<synchronous>, transform_indices = @transform_1, window_bounds = array<i64: 64, 128>}, {pipeline_mode = #tpu.pipeline_mode<synchronous>, transform_indices = @transform_2, window_bounds = array<i64: 1, 128>}, {pipeline_mode = #tpu.pipeline_mode<synchronous>, transform_indices = @transform_3, window_bounds = array<i64: 128, 128>}, {pipeline_mode = #tpu.pipeline_mode<synchronous>, transform_indices = @transform_4, window_bounds = array<i64: 1, 128>}, {pipeline_mode = #tpu.pipeline_mode<synchronous>, transform_indices = @transform_5, window_bounds = array<i64: 128, 128>}, {pipeline_mode = #tpu.pipeline_mode<synchronous>, transform_indices = @transform_6, window_bounds = array<i64: 1, 128>}, {pipeline_mode = #tpu.pipeline_mode<synchronous>, transform_indices = @transform_7, window_bounds = array<i64: 128, 32>}, {pipeline_mode = #tpu.pipeline_mode<synchronous>, transform_indices = @transform_8, window_bounds = array<i64: 1, 32>}, {transform_indices = @transform_9, window_bounds = array<i64: 256, 32>}]} {
    %c0 = arith.constant 0 : index
    %c0_0 = arith.constant 0 : index
    %0 = vector.load %arg1[%c0, %c0_0] : memref<256x64xf32, #tpu.memory_space<vmem>>, vector<256x64xf32>
    %1 = arith.truncf %0 : vector<256x64xf32> to vector<256x64xbf16>
    %c0_1 = arith.constant 0 : index
    %c0_2 = arith.constant 0 : index
    %2 = vector.load %arg2[%c0_1, %c0_2] : memref<64x128xbf16, #tpu.memory_space<vmem>>, vector<64x128xbf16>
    %cst = arith.constant dense<0.000000e+00> : vector<256x128xf32>
    %3 = tpu.matmul %1, %2, %cst {dimension_numbers = #tpu.dot_dimension_numbers<[1], [0], [0], [1], [0, 0, 1, 1], [], []>} : vector<256x64xbf16>, vector<64x128xbf16>, vector<256x128xf32> -> vector<256x128xf32>
    %c0_3 = arith.constant 0 : index
    %c0_4 = arith.constant 0 : index
    %4 = vector.load %arg3[%c0_3, %c0_4] : memref<1x128xf32, #tpu.memory_space<vmem>>, vector<1x128xf32>
    %5 = vector.broadcast %4 : vector<1x128xf32> to vector<256x128xf32>
    %6 = arith.addf %3, %5 : vector<256x128xf32>
    %cst_5 = arith.constant 0.000000e+00 : f32
    %7 = vector.broadcast %cst_5 : f32 to vector<256x128xf32>
    %8 = arith.maximumf %6, %7 : vector<256x128xf32>
    %9 = arith.truncf %8 : vector<256x128xf32> to vector<256x128xbf16>
    %c0_6 = arith.constant 0 : index
    %c0_7 = arith.constant 0 : index
    %10 = vector.load %arg4[%c0_6, %c0_7] : memref<128x128xbf16, #tpu.memory_space<vmem>>, vector<128x128xbf16>
    %cst_8 = arith.constant dense<0.000000e+00> : vector<256x128xf32>
    %11 = tpu.matmul %9, %10, %cst_8 {dimension_numbers = #tpu.dot_dimension_numbers<[1], [0], [0], [1], [0, 0, 1, 1], [], []>} : vector<256x128xbf16>, vector<128x128xbf16>, vector<256x128xf32> -> vector<256x128xf32>
    %c0_9 = arith.constant 0 : index
    %c0_10 = arith.constant 0 : index
    %12 = vector.load %arg5[%c0_9, %c0_10] : memref<1x128xf32, #tpu.memory_space<vmem>>, vector<1x128xf32>
    %13 = vector.broadcast %12 : vector<1x128xf32> to vector<256x128xf32>
    %14 = arith.addf %11, %13 : vector<256x128xf32>
    %cst_11 = arith.constant 0.000000e+00 : f32
    %15 = vector.broadcast %cst_11 : f32 to vector<256x128xf32>
    %16 = arith.maximumf %14, %15 : vector<256x128xf32>
    %17 = arith.truncf %16 : vector<256x128xf32> to vector<256x128xbf16>
    %c0_12 = arith.constant 0 : index
    %c0_13 = arith.constant 0 : index
    %18 = vector.load %arg6[%c0_12, %c0_13] : memref<128x128xbf16, #tpu.memory_space<vmem>>, vector<128x128xbf16>
    %cst_14 = arith.constant dense<0.000000e+00> : vector<256x128xf32>
    %19 = tpu.matmul %17, %18, %cst_14 {dimension_numbers = #tpu.dot_dimension_numbers<[1], [0], [0], [1], [0, 0, 1, 1], [], []>} : vector<256x128xbf16>, vector<128x128xbf16>, vector<256x128xf32> -> vector<256x128xf32>
    %c0_15 = arith.constant 0 : index
    %c0_16 = arith.constant 0 : index
    %20 = vector.load %arg7[%c0_15, %c0_16] : memref<1x128xf32, #tpu.memory_space<vmem>>, vector<1x128xf32>
    %21 = vector.broadcast %20 : vector<1x128xf32> to vector<256x128xf32>
    %22 = arith.addf %19, %21 : vector<256x128xf32>
    %cst_17 = arith.constant 0.000000e+00 : f32
    %23 = vector.broadcast %cst_17 : f32 to vector<256x128xf32>
    %24 = arith.maximumf %22, %23 : vector<256x128xf32>
    %25 = arith.truncf %24 : vector<256x128xf32> to vector<256x128xbf16>
    %c0_18 = arith.constant 0 : index
    %c0_19 = arith.constant 0 : index
    %26 = vector.load %arg8[%c0_18, %c0_19] : memref<128x32xbf16, #tpu.memory_space<vmem>>, vector<128x32xbf16>
    %cst_20 = arith.constant dense<0.000000e+00> : vector<256x32xf32>
    %27 = tpu.matmul %25, %26, %cst_20 {dimension_numbers = #tpu.dot_dimension_numbers<[1], [0], [0], [1], [0, 0, 1, 1], [], []>} : vector<256x128xbf16>, vector<128x32xbf16>, vector<256x32xf32> -> vector<256x32xf32>
    %c0_21 = arith.constant 0 : index
    %c0_22 = arith.constant 0 : index
    %28 = vector.load %arg9[%c0_21, %c0_22] : memref<1x32xf32, #tpu.memory_space<vmem>>, vector<1x32xf32>
    %29 = vector.broadcast %28 : vector<1x32xf32> to vector<256x32xf32>
    %30 = arith.addf %27, %29 : vector<256x32xf32>
    %c0_23 = arith.constant 0 : index
    %c0_24 = arith.constant 0 : index
    %31 = vector.load %arg10[%c0_23, %c0_24] : memref<256x32xf32, #tpu.memory_space<vmem>>, vector<256x32xf32>
    tpu.vector_store %arg10[%c0_23, %c0_24], %30 {strides = array<i32>} : memref<256x32xf32, #tpu.memory_space<vmem>>, vector<256x32xf32>,
    return
  }
  func.func @transform_0(%arg0: i32) -> (i32, i32) {
    %c0_i32 = arith.constant 0 : i32
    %c0_i32_0 = arith.constant 0 : i32
    return %arg0, %c0_i32 : i32, i32
  }
  func.func @transform_1(%arg0: i32) -> (i32, i32) {
    %c0_i32 = arith.constant 0 : i32
    %c0_i32_0 = arith.constant 0 : i32
    %c0_i32_1 = arith.constant 0 : i32
    return %c0_i32, %c0_i32_0 : i32, i32
  }
  func.func @transform_2(%arg0: i32) -> (i32, i32) {
    %c0_i32 = arith.constant 0 : i32
    %c0_i32_0 = arith.constant 0 : i32
    %c0_i32_1 = arith.constant 0 : i32
    return %c0_i32, %c0_i32_0 : i32, i32
  }
  func.func @transform_3(%arg0: i32) -> (i32, i32) {
    %c0_i32 = arith.constant 0 : i32
    %c0_i32_0 = arith.constant 0 : i32
    %c0_i32_1 = arith.constant 0 : i32
    return %c0_i32, %c0_i32_0 : i32, i32
  }
  func.func @transform_4(%arg0: i32) -> (i32, i32) {
    %c0_i32 = arith.constant 0 : i32
    %c0_i32_0 = arith.constant 0 : i32
    %c0_i32_1 = arith.constant 0 : i32
    return %c0_i32, %c0_i32_0 : i32, i32
  }
  func.func @transform_5(%arg0: i32) -> (i32, i32) {
    %c0_i32 = arith.constant 0 : i32
    %c0_i32_0 = arith.constant 0 : i32
    %c0_i32_1 = arith.constant 0 : i32
    return %c0_i32, %c0_i32_0 : i32, i32
  }
  func.func @transform_6(%arg0: i32) -> (i32, i32) {
    %c0_i32 = arith.constant 0 : i32
    %c0_i32_0 = arith.constant 0 : i32
    %c0_i32_1 = arith.constant 0 : i32
    return %c0_i32, %c0_i32_0 : i32, i32
  }
  func.func @transform_7(%arg0: i32) -> (i32, i32) {
    %c0_i32 = arith.constant 0 : i32
    %c0_i32_0 = arith.constant 0 : i32
    %c0_i32_1 = arith.constant 0 : i32
    return %c0_i32, %c0_i32_0 : i32, i32
  }
  func.func @transform_8(%arg0: i32) -> (i32, i32) {
    %c0_i32 = arith.constant 0 : i32
    %c0_i32_0 = arith.constant 0 : i32
    %c0_i32_1 = arith.constant 0 : i32
    return %c0_i32, %c0_i32_0 : i32, i32
  }
  func.func @transform_9(%arg0: i32) -> (i32, i32) {
    %c0_i32 = arith.constant 0 : i32
    %c0_i32_0 = arith.constant 0 : i32
    return %arg0, %c0_i32 : i32, i32
  }
}

</mosaic_0001>

<llo_original>
// kernel: mlp_forward.1
$region0: #{mlp_forward.1}
  #allocation0 [shape = 'u32[]', space=smem, size = 0x4, offset = 0x4, fixed_abs, tag = 'smem constant byte address 0x4 - core index']
  #allocation1 [shape = 'u32[72,128]{1,0:T(1,128)}', space=vmem, size = 0x9000, scoped, tag = 'internal scratch']
  %s0 = inlined_call_operand.vmem [shape: f32[512,64], index: 0, kind: input, shape index: {}]
  %s1 = inlined_call_operand.vmem [shape: bf16[64,128], index: 1, kind: input, shape index: {}]
  %s2 = inlined_call_operand.vmem [shape: f32[1,128], index: 2, kind: input, shape index: {}]
  %s3 = inlined_call_operand.vmem [shape: bf16[128,128], index: 3, kind: input, shape index: {}]
  %s4 = inlined_call_operand.vmem [shape: f32[1,128], index: 4, kind: input, shape index: {}]
  %s5 = inlined_call_operand.vmem [shape: bf16[128,128], index: 5, kind: input, shape index: {}]
  %s6 = inlined_call_operand.vmem [shape: f32[1,128], index: 6, kind: input, shape index: {}]
  %s7 = inlined_call_operand.vmem [shape: bf16[128,32], index: 7, kind: input, shape index: {}]
  %s8 = inlined_call_operand.vmem [shape: f32[1,32], index: 8, kind: input, shape index: {}]
  %s9 = inlined_call_operand.vmem [shape: f32[512,32], index: 9, kind: output, shape index: {}]
  %s10 = sld [smem:[#allocation0]]
  $region69: #{mlp_forward.1} parent=0
    _
  %s12 = ssub.s32 1, %s10
  %s13 = scalar_select 0, %s12, %s10
  loop: start=0, step=1, limit=4
  $region2: #{mlp_forward.1} parent=0 // loop_pre_header
    _
  $region3: #{mlp_forward.1} parent=0 // loop_header
    %s15 = sphi 0, %s19
    %p16 = scmp.ge.s32.totalorder %s15, 4
    %s25 = sphi 0, %s27
    %s28 = sphi 0, %s25
    %s29 = sphi 0, %s28
    %s45 = sphi 0, %s29
    %s49 = sphi 0, %s49
    %s51 = sphi 0, %s49
    %s52 = sphi 0, %s51
    %s66 = sphi 0, %s52
    %s70 = sphi 0, %s70
    %s72 = sphi 0, %s70
    %s73 = sphi 0, %s72
    %s87 = sphi 0, %s73
    %s91 = sphi 0, %s91
    %s93 = sphi 0, %s91
    %s94 = sphi 0, %s93
    %s108 = sphi 0, %s94
    %s112 = sphi 0, %s112
    %s114 = sphi 0, %s112
    %s115 = sphi 0, %s114
    %s129 = sphi 0, %s115
    %s133 = sphi 0, %s133
    %s135 = sphi 0, %s133
    %s136 = sphi 0, %s135
    %s150 = sphi 0, %s136
    %s154 = sphi 0, %s154
    %s156 = sphi 0, %s154
    %s157 = sphi 0, %s156
    %s171 = sphi 0, %s157
    %s175 = sphi 0, %s175
    %s177 = sphi 0, %s175
    %s178 = sphi 0, %s177
    %s192 = sphi 0, %s178
    %s196 = sphi 0, %s196
    %s198 = sphi 0, %s196
    %s199 = sphi 0, %s198
    %s213 = sphi 0, %s199
    %s219 = sphi 0, %s221
    %s222 = sphi 0, %s219
    %s223 = sphi 0, %s222
    %s239 = sphi 0, %s223
  $region4: #{mlp_forward.1} parent=0 // loop_header_branch
    %18 = sbr.rel (%p16) target = $region8
  $region5: #{mlp_forward.1} parent=0 // loop_body
    %s20 = ssub.s32 %s15, 1
    %s21 = ssub.s32 %s15, 2
    %s22 = sadd.s32 %s15, 1
    %s23 = ssub.s32 %s15, %s22
    %p24 = scmp.eq.s32.totalorder %s23, 0
    %s26 = sadd.s32 %s25, 1
    %s27 = scalar_select %p24, %s25, %s26
    %p30 = pneg %p24
    %p31 = scmp.eq.s32.totalorder %s15, 1
    %p32 = por %p30, %p31
    %p33 = scmp.ne.s32.totalorder %s25, %s28
    %p34 = scmp.eq.s32.totalorder %s15, 0
    %p35 = por %p33, %p34
    %p36 = scmp.ne.s32.totalorder %s25, %s28
    %p37 = scmp.eq.s32.totalorder %s20, 1
    %p38 = por %p36, %p37
    %p39 = scmp.ne.s32.totalorder %s28, %s29
    %p40 = scmp.eq.s32.totalorder %s20, 0
    %p41 = por %p39, %p40
    %p42 = scmp.ne.s32.totalorder %s28, %s29
    %p43 = scmp.eq.s32.totalorder %s21, 1
    %p44 = por %p42, %p43
    %p46 = scmp.ne.s32.totalorder %s29, %s45
    %p47 = scmp.eq.s32.totalorder %s21, 0
    %p48 = por %p46, %p47
    %s50 = sadd.s32 %s49, 1
    %p53 = scmp.eq.s32.totalorder %s15, 1
    %p54 = scmp.ne.s32.totalorder %s49, %s51
    %p55 = scmp.eq.s32.totalorder %s15, 0
    %p56 = por %p54, %p55
    %p57 = scmp.ne.s32.totalorder %s49, %s51
    %p58 = scmp.eq.s32.totalorder %s20, 1
    %p59 = por %p57, %p58
    %p60 = scmp.ne.s32.totalorder %s51, %s52
    %p61 = scmp.eq.s32.totalorder %s20, 0
    %p62 = por %p60, %p61
    %p63 = scmp.ne.s32.totalorder %s51, %s52
    %p64 = scmp.eq.s32.totalorder %s21, 1
    %p65 = por %p63, %p64
    %p67 = scmp.ne.s32.totalorder %s52, %s66
    %p68 = scmp.eq.s32.totalorder %s21, 0
    %p69 = por %p67, %p68
    %s71 = sadd.s32 %s70, 1
    %p74 = scmp.eq.s32.totalorder %s15, 1
    %p75 = scmp.ne.s32.totalorder %s70, %s72
    %p76 = scmp.eq.s32.totalorder %s15, 0
    %p77 = por %p75, %p76
    %p78 = scmp.ne.s32.totalorder %s70, %s72
    %p79 = scmp.eq.s32.totalorder %s20, 1
    %p80 = por %p78, %p79
    %p81 = scmp.ne.s32.totalorder %s72, %s73
    %p82 = scmp.eq.s32.totalorder %s20, 0
    %p83 = por %p81, %p82
    %p84 = scmp.ne.s32.totalorder %s72, %s73
    %p85 = scmp.eq.s32.totalorder %s21, 1
    %p86 = por %p84, %p85
    %p88 = scmp.ne.s32.totalorder %s73, %s87
    %p89 = scmp.eq.s32.totalorder %s21, 0
    %p90 = por %p88, %p89
    %s92 = sadd.s32 %s91, 1
    %p95 = scmp.eq.s32.totalorder %s15, 1
    %p96 = scmp.ne.s32.totalorder %s91, %s93
    %p97 = scmp.eq.s32.totalorder %s15, 0
    %p98 = por %p96, %p97
    %p99 = scmp.ne.s32.totalorder %s91, %s93
    %p100 = scmp.eq.s32.totalorder %s20, 1
    %p101 = por %p99, %p100
    %p102 = scmp.ne.s32.totalorder %s93, %s94
    %p103 = scmp.eq.s32.totalorder %s20, 0
    %p104 = por %p102, %p103
    %p105 = scmp.ne.s32.totalorder %s93, %s94
    %p106 = scmp.eq.s32.totalorder %s21, 1
    %p107 = por %p105, %p106
    %p109 = scmp.ne.s32.totalorder %s94, %s108
    %p110 = scmp.eq.s32.totalorder %s21, 0
    %p111 = por %p109, %p110
    %s113 = sadd.s32 %s112, 1
    %p116 = scmp.eq.s32.totalorder %s15, 1
    %p117 = scmp.ne.s32.totalorder %s112, %s114
    %p118 = scmp.eq.s32.totalorder %s15, 0
    %p119 = por %p117, %p118
    %p120 = scmp.ne.s32.totalorder %s112, %s114
    %p121 = scmp.eq.s32.totalorder %s20, 1
    %p122 = por %p120, %p121
    %p123 = scmp.ne.s32.totalorder %s114, %s115
    %p124 = scmp.eq.s32.totalorder %s20, 0
    %p125 = por %p123, %p124
    %p126 = scmp.ne.s32.totalorder %s114, %s115
    %p127 = scmp.eq.s32.totalorder %s21, 1
    %p128 = por %p126, %p127
    %p130 = scmp.ne.s32.totalorder %s115, %s129
    %p131 = scmp.eq.s32.totalorder %s21, 0
    %p132 = por %p130, %p131
    %s134 = sadd.s32 %s133, 1
    %p137 = scmp.eq.s32.totalorder %s15, 1
    %p138 = scmp.ne.s32.totalorder %s133, %s135
    %p139 = scmp.eq.s32.totalorder %s15, 0
    %p140 = por %p138, %p139
    %p141 = scmp.ne.s32.totalorder %s133, %s135
    %p142 = scmp.eq.s32.totalorder %s20, 1
    %p143 = por %p141, %p142
    %p144 = scmp.ne.s32.totalorder %s135, %s136
    %p145 = scmp.eq.s32.totalorder %s20, 0
    %p146 = por %p144, %p145
    %p147 = scmp.ne.s32.totalorder %s135, %s136
    %p148 = scmp.eq.s32.totalorder %s21, 1
    %p149 = por %p147, %p148
    %p151 = scmp.ne.s32.totalorder %s136, %s150
    %p152 = scmp.eq.s32.totalorder %s21, 0
    %p153 = por %p151, %p152
    %s155 = sadd.s32 %s154, 1
    %p158 = scmp.eq.s32.totalorder %s15, 1
    %p159 = scmp.ne.s32.totalorder %s154, %s156
    %p160 = scmp.eq.s32.totalorder %s15, 0
    %p161 = por %p159, %p160
    %p162 = scmp.ne.s32.totalorder %s154, %s156
    %p163 = scmp.eq.s32.totalorder %s20, 1
    %p164 = por %p162, %p163
    %p165 = scmp.ne.s32.totalorder %s156, %s157
    %p166 = scmp.eq.s32.totalorder %s20, 0
    %p167 = por %p165, %p166
    %p168 = scmp.ne.s32.totalorder %s156, %s157
    %p169 = scmp.eq.s32.totalorder %s21, 1
    %p170 = por %p168, %p169
    %p172 = scmp.ne.s32.totalorder %s157, %s171
    %p173 = scmp.eq.s32.totalorder %s21, 0
    %p174 = por %p172, %p173
    %s176 = sadd.s32 %s175, 1
    %p179 = scmp.eq.s32.totalorder %s15, 1
    %p180 = scmp.ne.s32.totalorder %s175, %s177
    %p181 = scmp.eq.s32.totalorder %s15, 0
    %p182 = por %p180, %p181
    %p183 = scmp.ne.s32.totalorder %s175, %s177
    %p184 = scmp.eq.s32.totalorder %s20, 1
    %p185 = por %p183, %p184
    %p186 = scmp.ne.s32.totalorder %s177, %s178
    %p187 = scmp.eq.s32.totalorder %s20, 0
    %p188 = por %p186, %p187
    %p189 = scmp.ne.s32.totalorder %s177, %s178
    %p190 = scmp.eq.s32.totalorder %s21, 1
    %p191 = por %p189, %p190
    %p193 = scmp.ne.s32.totalorder %s178, %s192
    %p194 = scmp.eq.s32.totalorder %s21, 0
    %p195 = por %p193, %p194
    %s197 = sadd.s32 %s196, 1
    %p200 = scmp.eq.s32.totalorder %s15, 1
    %p201 = scmp.ne.s32.totalorder %s196, %s198
    %p202 = scmp.eq.s32.totalorder %s15, 0
    %p203 = por %p201, %p202
    %p204 = scmp.ne.s32.totalorder %s196, %s198
    %p205 = scmp.eq.s32.totalorder %s20, 1
    %p206 = por %p204, %p205
    %p207 = scmp.ne.s32.totalorder %s198, %s199
    %p208 = scmp.eq.s32.totalorder %s20, 0
    %p209 = por %p207, %p208
    %p210 = scmp.ne.s32.totalorder %s198, %s199
    %p211 = scmp.eq.s32.totalorder %s21, 1
    %p212 = por %p210, %p211
    %p214 = scmp.ne.s32.totalorder %s199, %s213
    %p215 = scmp.eq.s32.totalorder %s21, 0
    %p216 = por %p214, %p215
    %s217 = ssub.s32 %s15, %s22
    %p218 = scmp.eq.s32.totalorder %s217, 0
    %s220 = sadd.s32 %s219, 1
    %s221 = scalar_select %p218, %s219, %s220
    %p224 = pneg %p218
    %p225 = scmp.eq.s32.totalorder %s15, 1
    %p226 = por %p224, %p225
    %p227 = scmp.ne.s32.totalorder %s219, %s222
    %p228 = scmp.eq.s32.totalorder %s15, 0
    %p229 = por %p227, %p228
    %p230 = scmp.ne.s32.totalorder %s219, %s222
    %p231 = scmp.eq.s32.totalorder %s20, 1
    %p232 = por %p230, %p231
    %p233 = scmp.ne.s32.totalorder %s222, %s223
    %p234 = scmp.eq.s32.totalorder %s20, 0
    %p235 = por %p233, %p234
    %p236 = scmp.ne.s32.totalorder %s222, %s223
    %p237 = scmp.eq.s32.totalorder %s21, 1
    %p238 = por %p236, %p237
    %p240 = scmp.ne.s32.totalorder %s223, %s239
    %p241 = scmp.eq.s32.totalorder %s21, 0
    %p242 = por %p240, %p241
    %p243 = scmp.le.s32.totalorder 1, %s15
    %p244 = scmp.lt.s32.totalorder %s15, 3
    %p245 = pnand %p243, %p244
    %p246 = pneg %p245
    // Predicated region
    $region9: #{mlp_forward.1} parent=5 // pred_check
      _
    $region10: #{mlp_forward.1} parent=5 // pred_check_branch
      %248 = sbr.rel (%p245) target = $region12
    $region11: #{mlp_forward.1} parent=5 // pred_region
      %s249 = ssub.s32 %s15, 1
      // Predicated region
      $region13: #{mlp_forward.1} parent=11 // pred_check
        %p250 = pneg %p62
      $region14: #{mlp_forward.1} parent=11 // pred_check_branch
        %252 = sbr.rel (%p250) target = $region16
      $region15: #{mlp_forward.1} parent=11 // pred_region
        _
      $region16: #{mlp_forward.1} parent=11 // pred_fallthru
        _
      // Predicated region
      $region17: #{mlp_forward.1} parent=11 // pred_check
        %p253 = pneg %p83
      $region18: #{mlp_forward.1} parent=11 // pred_check_branch
        %255 = sbr.rel (%p253) target = $region20
      $region19: #{mlp_forward.1} parent=11 // pred_region
        _
      $region20: #{mlp_forward.1} parent=11 // pred_fallthru
        _
      // Predicated region
      $region21: #{mlp_forward.1} parent=11 // pred_check
        %p256 = pneg %p104
      $region22: #{mlp_forward.1} parent=11 // pred_check_branch
        %258 = sbr.rel (%p256) target = $region24
      $region23: #{mlp_forward.1} parent=11 // pred_region
        _
      $region24: #{mlp_forward.1} parent=11 // pred_fallthru
        _
      // Predicated region
      $region25: #{mlp_forward.1} parent=11 // pred_check
        %p259 = pneg %p125
      $region26: #{mlp_forward.1} parent=11 // pred_check_branch
        %261 = sbr.rel (%p259) target = $region28
      $region27: #{mlp_forward.1} parent=11 // pred_region
        _
      $region28: #{mlp_forward.1} parent=11 // pred_fallthru
        _
      // Predicated region
      $region29: #{mlp_forward.1} parent=11 // pred_check
        %p262 = pneg %p146
      $region30: #{mlp_forward.1} parent=11 // pred_check_branch
        %264 = sbr.rel (%p262) target = $region32
      $region31: #{mlp_forward.1} parent=11 // pred_region
        _
      $region32: #{mlp_forward.1} parent=11 // pred_fallthru
        _
      // Predicated region
      $region33: #{mlp_forward.1} parent=11 // pred_check
        %p265 = pneg %p167
      $region34: #{mlp_forward.1} parent=11 // pred_check_branch
        %267 = sbr.rel (%p265) target = $region36
      $region35: #{mlp_forward.1} parent=11 // pred_region
        _
      $region36: #{mlp_forward.1} parent=11 // pred_fallthru
        _
      // Predicated region
      $region37: #{mlp_forward.1} parent=11 // pred_check
        %p268 = pneg %p188
      $region38: #{mlp_forward.1} parent=11 // pred_check_branch
        %270 = sbr.rel (%p268) target = $region40
      $region39: #{mlp_forward.1} parent=11 // pred_region
        _
      $region40: #{mlp_forward.1} parent=11 // pred_fallthru
        _
      // Predicated region
      $region41: #{mlp_forward.1} parent=11 // pred_check
        %p271 = pneg %p209
      $region42: #{mlp_forward.1} parent=11 // pred_check_branch
        %273 = sbr.rel (%p271) target = $region44
      $region43: #{mlp_forward.1} parent=11 // pred_region
        _
      $region44: #{mlp_forward.1} parent=11 // pred_fallthru
        _
    $region12: #{mlp_forward.1} parent=5 // pred_fallthru
      _
    %p274 = scmp.lt.s32.totalorder %s15, 2
    // Predicated region
    $region45: #{mlp_forward.1} parent=5 // pred_check
      %p275 = pneg %p274
    $region46: #{mlp_forward.1} parent=5 // pred_check_branch
      %277 = sbr.rel (%p275) target = $region48
    $region47: #{mlp_forward.1} parent=5 // pred_region
      // Predicated region
      $region49: #{mlp_forward.1} parent=47 // pred_check
        %p278 = pneg %p35
      $region50: #{mlp_forward.1} parent=47 // pred_check_branch
        %280 = sbr.rel (%p278) target = $region52
      $region51: #{mlp_forward.1} parent=47 // pred_region
        %s281 = smul.u32 32, %s15
        %p282 = scmp.lt.s32.totalorder %s281, 63
        %s283 = scalar_select %p282, %s281, 63
        %s284 = smul.addr %s283, 8
        %s285 = scalar_lea.vmem %s0, %s284
        %s286 = smul.u32 32, %s15
      $region52: #{mlp_forward.1} parent=47 // pred_fallthru
        _
    $region48: #{mlp_forward.1} parent=5 // pred_fallthru
      _
    %p287 = scmp.le.s32.totalorder 1, %s15
    %p288 = scmp.lt.s32.totalorder %s15, 3
    %p289 = pnand %p287, %p288
    %p290 = pneg %p289
    // Predicated region
    $region53: #{mlp_forward.1} parent=5 // pred_check
      _
    $region54: #{mlp_forward.1} parent=5 // pred_check_branch
      %292 = sbr.rel (%p289) target = $region56
    $region55: #{mlp_forward.1} parent=5 // pred_region
      %s293 = ssub.s32 %s15, 1
      %s294 = smul.u32 32, %s20
      %p295 = scmp.lt.s32.totalorder %s294, 63
      %s296 = scalar_select %p295, %s294, 63
      %s297 = smul.addr %s296, 8
      %s298 = scalar_lea.vmem %s0, %s297
      %p299 = pneg %p41
      %p300 = pneg %p38
      %p301 = pneg %p62
      %p302 = pneg %p59
      %p303 = pneg %p83
      %p304 = pneg %p80
      %p305 = pneg %p104
      %p306 = pneg %p101
      %p307 = pneg %p125
      %p308 = pneg %p122
      %p309 = pneg %p146
      %p310 = pneg %p143
      %p311 = pneg %p167
      %p312 = pneg %p164
      %p313 = pneg %p188
      %p314 = pneg %p185
      %p315 = pneg %p209
      %p316 = pneg %p206
      %p317 = pneg %p235
      %p318 = pneg %p232
      %s319 = smul.u32 32, %s20
      %p320 = scmp.lt.s32.totalorder %s319, 63
      %s321 = scalar_select %p320, %s319, 63
      %s322 = smul.addr %s321, 8
      %s323 = scalar_lea.vmem %s9, %s322
      %s324 = smul.u32 32, %s20
      %p325 = scmp.lt.s32.totalorder %s324, 63
      %s326 = scalar_select %p325, %s324, 63
      %s327 = smul.addr %s326, 8
      %s328 = scalar_lea.vmem %s0, %s327
      %s329 = smul.u32 32, %s20
      %s330 = smul.u32 32, %s20
      %p331 = scmp.lt.s32.totalorder %s330, 63
      %s332 = scalar_select %p331, %s330, 63
      %s333 = smul.addr %s332, 8
      %s334 = scalar_lea.vmem %s9, %s333
      %s335 = smul.u32 32, %s20
      %v337 = vld [vmem:[%s328] sm:$0xff]
      %v338 = vld [vmem:[%s328 + $0x8] sm:$0xff]
      %v339 = vld [vmem:[%s328 + $0x10] sm:$0xff]
      %v340 = vld [vmem:[%s328 + $0x18] sm:$0xff]
      %v341 = vld [vmem:[%s328 + $0x20] sm:$0xff]
      %v342 = vld [vmem:[%s328 + $0x28] sm:$0xff]
      %v343 = vld [vmem:[%s328 + $0x30] sm:$0xff]
      %v344 = vld [vmem:[%s328 + $0x38] sm:$0xff]
      %v345 = vld [vmem:[%s328 + $0x40] sm:$0xff]
      %v346 = vld [vmem:[%s328 + $0x48] sm:$0xff]
      %v347 = vld [vmem:[%s328 + $0x50] sm:$0xff]
      %v348 = vld [vmem:[%s328 + $0x58] sm:$0xff]
      %v349 = vld [vmem:[%s328 + $0x60] sm:$0xff]
      %v350 = vld [vmem:[%s328 + $0x68] sm:$0xff]
      %v351 = vld [vmem:[%s328 + $0x70] sm:$0xff]
      %v352 = vld [vmem:[%s328 + $0x78] sm:$0xff]
      %v353 = vld [vmem:[%s328 + $0x80] sm:$0xff]
      %v354 = vld [vmem:[%s328 + $0x88] sm:$0xff]
      %v355 = vld [vmem:[%s328 + $0x90] sm:$0xff]
      %v356 = vld [vmem:[%s328 + $0x98] sm:$0xff]
      %v357 = vld [vmem:[%s328 + $0xa0] sm:$0xff]
      %v358 = vld [vmem:[%s328 + $0xa8] sm:$0xff]
      %v359 = vld [vmem:[%s328 + $0xb0] sm:$0xff]
      %v360 = vld [vmem:[%s328 + $0xb8] sm:$0xff]
      %v361 = vld [vmem:[%s328 + $0xc0] sm:$0xff]
      %v362 = vld [vmem:[%s328 + $0xc8] sm:$0xff]
      %v363 = vld [vmem:[%s328 + $0xd0] sm:$0xff]
      %v364 = vld [vmem:[%s328 + $0xd8] sm:$0xff]
      %v365 = vld [vmem:[%s328 + $0xe0] sm:$0xff]
      %v366 = vld [vmem:[%s328 + $0xe8] sm:$0xff]
      %v367 = vld [vmem:[%s328 + $0xf0] sm:$0xff]
      %v368 = vld [vmem:[%s328 + $0xf8] sm:$0xff]
      %v369 = vpack.c.bf16 %v338, %v337
      %v370 = vpack.c.bf16 %v340, %v339
      %v371 = vpack.c.bf16 %v342, %v341
      %v372 = vpack.c.bf16 %v344, %v343
      %v373 = vpack.c.bf16 %v346, %v345
      %v374 = vpack.c.bf16 %v348, %v347
      %v375 = vpack.c.bf16 %v350, %v349
      %v376 = vpack.c.bf16 %v352, %v351
      %v377 = vpack.c.bf16 %v354, %v353
      %v378 = vpack.c.bf16 %v356, %v355
      %v379 = vpack.c.bf16 %v358, %v357
      %v380 = vpack.c.bf16 %v360, %v359
      %v381 = vpack.c.bf16 %v362, %v361
      %v382 = vpack.c.bf16 %v364, %v363
      %v383 = vpack.c.bf16 %v366, %v365
      %v384 = vpack.c.bf16 %v368, %v367
      %v385 = vld [vmem:[%s1] sm:$0xf]
      %v386 = vld [vmem:[%s1 + $0x4] sm:$0xf]
      %v387 = vld [vmem:[%s1 + $0x8] sm:$0xf]
      %v388 = vld [vmem:[%s1 + $0xc] sm:$0xf]
      %v389 = vld [vmem:[%s1 + $0x10] sm:$0xf]
      %v390 = vld [vmem:[%s1 + $0x14] sm:$0xf]
      %v391 = vld [vmem:[%s1 + $0x18] sm:$0xf]
      %v392 = vld [vmem:[%s1 + $0x1c] sm:$0xf]
      %v393 = vld [vmem:[%s2] sm:$0x1]
      %v395 = vperm.slane %v393, 0
      %v405 = vunpack.c.l.b16 %v385
      %v406 = vunpack.c.l.b16 %v386
      %v407 = vunpack.c.l.b16 %v387
      %v408 = vunpack.c.l.b16 %v388
      %v409 = vunpack.c.l.b16 %v389
      %v410 = vunpack.c.l.b16 %v390
      %v411 = vunpack.c.l.b16 %v391
      %v412 = vunpack.c.l.b16 %v392
      %v413 = vpack.c.b16 %v406, %v405
      %v414 = vpack.c.b16 %v408, %v407
      %v415 = vpack.c.b16 %v410, %v409
      %v416 = vpack.c.b16 %v412, %v411
      %vm421 = vcmask 523264
      %v423 = vsel %vm421, %v369, 0
      %v426 = vsel %vm421, %v370, 0
      %v429 = vsel %vm421, %v371, 0
      %v432 = vsel %vm421, %v372, 0
      %v435 = vsel %vm421, %v373, 0
      %v438 = vsel %vm421, %v374, 0
      %v441 = vsel %vm421, %v375, 0
      %v444 = vsel %vm421, %v376, 0
      %v447 = vsel %vm421, %v377, 0
      %v450 = vsel %vm421, %v378, 0
      %v453 = vsel %vm421, %v379, 0
      %v456 = vsel %vm421, %v380, 0
      %v459 = vsel %vm421, %v381, 0
      %v462 = vsel %vm421, %v382, 0
      %v465 = vsel %vm421, %v383, 0
      %v468 = vsel %vm421, %v384, 0
      %470 = vmatpush.bf16.msra.mxu0 0
      %471 = vmatpush.bf16.msra.mxu0 0
      %472 = vmatpush.bf16.msra.mxu0 0
      %473 = vmatpush.bf16.msra.mxu0 0
      %474 = vmatpush.bf16.msra.mxu0 %v416
      %475 = vmatpush.bf16.msra.mxu0 %v415
      %476 = vmatpush.bf16.msra.mxu0 %v414
      %477 = vmatpush.bf16.msra.mxu0 %v413
      %478 = vmatmul.bf16.gmra.mxu0 %v423
      %v479 = vpop.f32.mrf.mxu0
      %v480 = vadd.f32 %v395, %v479
      %v481 = vpop.f32.mrf.mxu0
      %v482 = vadd.f32 %v395, %v481
      %483 = vmatmul.bf16.gmra.mxu0 %v426
      %v484 = vpop.f32.mrf.mxu0
      %v485 = vadd.f32 %v395, %v484
      %v486 = vpop.f32.mrf.mxu0
      %v487 = vadd.f32 %v395, %v486
      %488 = vmatmul.bf16.gmra.mxu0 %v429
      %v489 = vpop.f32.mrf.mxu0
      %v490 = vadd.f32 %v395, %v489
      %v491 = vpop.f32.mrf.mxu0
      %v492 = vadd.f32 %v395, %v491
      %493 = vmatmul.bf16.gmra.mxu0 %v432
      %v494 = vpop.f32.mrf.mxu0
      %v495 = vadd.f32 %v395, %v494
      %v496 = vpop.f32.mrf.mxu0
      %v497 = vadd.f32 %v395, %v496
      %498 = vmatmul.bf16.gmra.mxu0 %v435
      %v499 = vpop.f32.mrf.mxu0
      %v500 = vadd.f32 %v395, %v499
      %v501 = vpop.f32.mrf.mxu0
      %v502 = vadd.f32 %v395, %v501
      %503 = vmatmul.bf16.gmra.mxu0 %v438
      %v504 = vpop.f32.mrf.mxu0
      %v505 = vadd.f32 %v395, %v504
      %v506 = vpop.f32.mrf.mxu0
      %v507 = vadd.f32 %v395, %v506
      %508 = vmatmul.bf16.gmra.mxu0 %v441
      %v509 = vpop.f32.mrf.mxu0
      %v510 = vadd.f32 %v395, %v509
      %v511 = vpop.f32.mrf.mxu0
      %v512 = vadd.f32 %v395, %v511
      %513 = vmatmul.bf16.gmra.mxu0 %v444
      %v514 = vpop.f32.mrf.mxu0
      %v515 = vadd.f32 %v395, %v514
      %v516 = vpop.f32.mrf.mxu0
      %v517 = vadd.f32 %v395, %v516
      %518 = vmatmul.bf16.gmra.mxu0 %v447
      %v519 = vpop.f32.mrf.mxu0
      %v520 = vadd.f32 %v395, %v519
      %v521 = vpop.f32.mrf.mxu0
      %v522 = vadd.f32 %v395, %v521
      %523 = vmatmul.bf16.gmra.mxu0 %v450
      %v524 = vpop.f32.mrf.mxu0
      %v525 = vadd.f32 %v395, %v524
      %v526 = vpop.f32.mrf.mxu0
      %v527 = vadd.f32 %v395, %v526
      %528 = vmatmul.bf16.gmra.mxu0 %v453
      %v529 = vpop.f32.mrf.mxu0
      %v530 = vadd.f32 %v395, %v529
      %v531 = vpop.f32.mrf.mxu0
      %v532 = vadd.f32 %v395, %v531
      %533 = vmatmul.bf16.gmra.mxu0 %v456
      %v534 = vpop.f32.mrf.mxu0
      %v535 = vadd.f32 %v395, %v534
      %v536 = vpop.f32.mrf.mxu0
      %v537 = vadd.f32 %v395, %v536
      %538 = vmatmul.bf16.gmra.mxu0 %v459
      %v539 = vpop.f32.mrf.mxu0
      %v540 = vadd.f32 %v395, %v539
      %v541 = vpop.f32.mrf.mxu0
      %v542 = vadd.f32 %v395, %v541
      %543 = vmatmul.bf16.gmra.mxu0 %v462
      %v544 = vpop.f32.mrf.mxu0
      %v545 = vadd.f32 %v395, %v544
      %v546 = vpop.f32.mrf.mxu0
      %v547 = vadd.f32 %v395, %v546
      %548 = vmatmul.bf16.gmra.mxu0 %v465
      %v549 = vpop.f32.mrf.mxu0
      %v550 = vadd.f32 %v395, %v549
      %v551 = vpop.f32.mrf.mxu0
      %v552 = vadd.f32 %v395, %v551
      %553 = vmatmul.bf16.gmra.mxu0 %v468
      %v554 = vpop.f32.mrf.mxu0
      %v555 = vadd.f32 %v395, %v554
      %v556 = vpop.f32.mrf.mxu0
      %v557 = vadd.f32 %v395, %v556
      %558 = vdwg.mxu0
      %v559 = vmax.f32 %v480, 0.0
      %v560 = vmax.f32 %v482, 0.0
      %v561 = vmax.f32 %v485, 0.0
      %v562 = vmax.f32 %v487, 0.0
      %v563 = vmax.f32 %v490, 0.0
      %v564 = vmax.f32 %v492, 0.0
      %v565 = vmax.f32 %v495, 0.0
      %v566 = vmax.f32 %v497, 0.0
      %v567 = vmax.f32 %v500, 0.0
      %v568 = vmax.f32 %v502, 0.0
      %v569 = vmax.f32 %v505, 0.0
      %v570 = vmax.f32 %v507, 0.0
      %v571 = vmax.f32 %v510, 0.0
      %v572 = vmax.f32 %v512, 0.0
      %v573 = vmax.f32 %v515, 0.0
      %v574 = vmax.f32 %v517, 0.0
      %v575 = vmax.f32 %v520, 0.0
      %v576 = vmax.f32 %v522, 0.0
      %v577 = vmax.f32 %v525, 0.0
      %v578 = vmax.f32 %v527, 0.0
      %v579 = vmax.f32 %v530, 0.0
      %v580 = vmax.f32 %v532, 0.0
      %v581 = vmax.f32 %v535, 0.0
      %v582 = vmax.f32 %v537, 0.0
      %v583 = vmax.f32 %v540, 0.0
      %v584 = vmax.f32 %v542, 0.0
      %v585 = vmax.f32 %v545, 0.0
      %v586 = vmax.f32 %v547, 0.0
      %v587 = vmax.f32 %v550, 0.0
      %v588 = vmax.f32 %v552, 0.0
      %v589 = vmax.f32 %v555, 0.0
      %v590 = vmax.f32 %v557, 0.0
      %v591 = vpack.c.bf16 %v560, %v559
      %v592 = vpack.c.bf16 %v562, %v561
      %v593 = vpack.c.bf16 %v564, %v563
      %v594 = vpack.c.bf16 %v566, %v565
      %v595 = vpack.c.bf16 %v568, %v567
      %v596 = vpack.c.bf16 %v570, %v569
      %v597 = vpack.c.bf16 %v572, %v571
      %v598 = vpack.c.bf16 %v574, %v573
      %v599 = vpack.c.bf16 %v576, %v575
      %v600 = vpack.c.bf16 %v578, %v577
      %v601 = vpack.c.bf16 %v580, %v579
      %v602 = vpack.c.bf16 %v582, %v581
      %v603 = vpack.c.bf16 %v584, %v583
      %v604 = vpack.c.bf16 %v586, %v585
      %v605 = vpack.c.bf16 %v588, %v587
      %v606 = vpack.c.bf16 %v590, %v589
      %v607 = vld [vmem:[%s3] sm:$0xf]
      %v608 = vld [vmem:[%s3 + $0x4] sm:$0xf]
      %v609 = vld [vmem:[%s3 + $0x8] sm:$0xf]
      %v610 = vld [vmem:[%s3 + $0xc] sm:$0xf]
      %v611 = vld [vmem:[%s3 + $0x10] sm:$0xf]
      %v612 = vld [vmem:[%s3 + $0x14] sm:$0xf]
      %v613 = vld [vmem:[%s3 + $0x18] sm:$0xf]
      %v614 = vld [vmem:[%s3 + $0x1c] sm:$0xf]
      %v615 = vld [vmem:[%s3 + $0x20] sm:$0xf]
      %v616 = vld [vmem:[%s3 + $0x24] sm:$0xf]
      %v617 = vld [vmem:[%s3 + $0x28] sm:$0xf]
      %v618 = vld [vmem:[%s3 + $0x2c] sm:$0xf]
      %v619 = vld [vmem:[%s3 + $0x30] sm:$0xf]
      %v620 = vld [vmem:[%s3 + $0x34] sm:$0xf]
      %v621 = vld [vmem:[%s3 + $0x38] sm:$0xf]
      %v622 = vld [vmem:[%s3 + $0x3c] sm:$0xf]
      %v623 = vld [vmem:[%s4] sm:$0x1]
      %v625 = vperm.slane %v623, 0
      %v643 = vunpack.c.l.b16 %v607
      %v644 = vunpack.c.l.b16 %v608
      %v645 = vunpack.c.l.b16 %v609
      %v646 = vunpack.c.l.b16 %v610
      %v647 = vunpack.c.l.b16 %v611
      %v648 = vunpack.c.l.b16 %v612
      %v649 = vunpack.c.l.b16 %v613
      %v650 = vunpack.c.l.b16 %v614
      %v651 = vunpack.c.l.b16 %v615
      %v652 = vunpack.c.l.b16 %v616
      %v653 = vunpack.c.l.b16 %v617
      %v654 = vunpack.c.l.b16 %v618
      %v655 = vunpack.c.l.b16 %v619
      %v656 = vunpack.c.l.b16 %v620
      %v657 = vunpack.c.l.b16 %v621
      %v658 = vunpack.c.l.b16 %v622
      %v659 = vpack.c.b16 %v644, %v643
      %v660 = vpack.c.b16 %v646, %v645
      %v661 = vpack.c.b16 %v648, %v647
      %v662 = vpack.c.b16 %v650, %v649
      %v663 = vpack.c.b16 %v652, %v651
      %v664 = vpack.c.b16 %v654, %v653
      %v665 = vpack.c.b16 %v656, %v655
      %v666 = vpack.c.b16 %v658, %v657
      %675 = vmatpush.bf16.msra.mxu0 %v666
      %676 = vmatpush.bf16.msra.mxu0 %v665
      %677 = vmatpush.bf16.msra.mxu0 %v664
      %678 = vmatpush.bf16.msra.mxu0 %v663
      %679 = vmatpush.bf16.msra.mxu0 %v662
      %680 = vmatpush.bf16.msra.mxu0 %v661
      %681 = vmatpush.bf16.msra.mxu0 %v660
      %682 = vmatpush.bf16.msra.mxu0 %v659
      %683 = vmatmul.bf16.gmra.mxu0 %v591
      %v684 = vpop.f32.mrf.mxu0
      %v685 = vadd.f32 %v625, %v684
      %v686 = vpop.f32.mrf.mxu0
      %v687 = vadd.f32 %v625, %v686
      %688 = vmatmul.bf16.gmra.mxu0 %v592
      %v689 = vpop.f32.mrf.mxu0
      %v690 = vadd.f32 %v625, %v689
      %v691 = vpop.f32.mrf.mxu0
      %v692 = vadd.f32 %v625, %v691
      %693 = vmatmul.bf16.gmra.mxu0 %v593
      %v694 = vpop.f32.mrf.mxu0
      %v695 = vadd.f32 %v625, %v694
      %v696 = vpop.f32.mrf.mxu0
      %v697 = vadd.f32 %v625, %v696
      %698 = vmatmul.bf16.gmra.mxu0 %v594
      %v699 = vpop.f32.mrf.mxu0
      %v700 = vadd.f32 %v625, %v699
      %v701 = vpop.f32.mrf.mxu0
      %v702 = vadd.f32 %v625, %v701
      %703 = vmatmul.bf16.gmra.mxu0 %v595
      %v704 = vpop.f32.mrf.mxu0
      %v705 = vadd.f32 %v625, %v704
      %v706 = vpop.f32.mrf.mxu0
      %v707 = vadd.f32 %v625, %v706
      %708 = vmatmul.bf16.gmra.mxu0 %v596
      %v709 = vpop.f32.mrf.mxu0
      %v710 = vadd.f32 %v625, %v709
      %v711 = vpop.f32.mrf.mxu0
      %v712 = vadd.f32 %v625, %v711
      %713 = vmatmul.bf16.gmra.mxu0 %v597
      %v714 = vpop.f32.mrf.mxu0
      %v715 = vadd.f32 %v625, %v714
      %v716 = vpop.f32.mrf.mxu0
      %v717 = vadd.f32 %v625, %v716
      %718 = vmatmul.bf16.gmra.mxu0 %v598
      %v719 = vpop.f32.mrf.mxu0
      %v720 = vadd.f32 %v625, %v719
      %v721 = vpop.f32.mrf.mxu0
      %v722 = vadd.f32 %v625, %v721
      %723 = vmatmul.bf16.gmra.mxu0 %v599
      %v724 = vpop.f32.mrf.mxu0
      %v725 = vadd.f32 %v625, %v724
      %v726 = vpop.f32.mrf.mxu0
      %v727 = vadd.f32 %v625, %v726
      %728 = vmatmul.bf16.gmra.mxu0 %v600
      %v729 = vpop.f32.mrf.mxu0
      %v730 = vadd.f32 %v625, %v729
      %v731 = vpop.f32.mrf.mxu0
      %v732 = vadd.f32 %v625, %v731
      %733 = vmatmul.bf16.gmra.mxu0 %v601
      %v734 = vpop.f32.mrf.mxu0
      %v735 = vadd.f32 %v625, %v734
      %v736 = vpop.f32.mrf.mxu0
      %v737 = vadd.f32 %v625, %v736
      %738 = vmatmul.bf16.gmra.mxu0 %v602
      %v739 = vpop.f32.mrf.mxu0
      %v740 = vadd.f32 %v625, %v739
      %v741 = vpop.f32.mrf.mxu0
      %v742 = vadd.f32 %v625, %v741
      %743 = vmatmul.bf16.gmra.mxu0 %v603
      %v744 = vpop.f32.mrf.mxu0
      %v745 = vadd.f32 %v625, %v744
      %v746 = vpop.f32.mrf.mxu0
      %v747 = vadd.f32 %v625, %v746
      %748 = vmatmul.bf16.gmra.mxu0 %v604
      %v749 = vpop.f32.mrf.mxu0
      %v750 = vadd.f32 %v625, %v749
      %v751 = vpop.f32.mrf.mxu0
      %v752 = vadd.f32 %v625, %v751
      %753 = vmatmul.bf16.gmra.mxu0 %v605
      %v754 = vpop.f32.mrf.mxu0
      %v755 = vadd.f32 %v625, %v754
      %v756 = vpop.f32.mrf.mxu0
      %v757 = vadd.f32 %v625, %v756
      %758 = vmatmul.bf16.gmra.mxu0 %v606
      %v759 = vpop.f32.mrf.mxu0
      %v760 = vadd.f32 %v625, %v759
      %v761 = vpop.f32.mrf.mxu0
      %v762 = vadd.f32 %v625, %v761
      %763 = vdwg.mxu0
      %v764 = vmax.f32 %v685, 0.0
      %v765 = vmax.f32 %v687, 0.0
      %v766 = vmax.f32 %v690, 0.0
      %v767 = vmax.f32 %v692, 0.0
      %v768 = vmax.f32 %v695, 0.0
      %v769 = vmax.f32 %v697, 0.0
      %v770 = vmax.f32 %v700, 0.0
      %v771 = vmax.f32 %v702, 0.0
      %v772 = vmax.f32 %v705, 0.0
      %v773 = vmax.f32 %v707, 0.0
      %v774 = vmax.f32 %v710, 0.0
      %v775 = vmax.f32 %v712, 0.0
      %v776 = vmax.f32 %v715, 0.0
      %v777 = vmax.f32 %v717, 0.0
      %v778 = vmax.f32 %v720, 0.0
      %v779 = vmax.f32 %v722, 0.0
      %v780 = vmax.f32 %v725, 0.0
      %v781 = vmax.f32 %v727, 0.0
      %v782 = vmax.f32 %v730, 0.0
      %v783 = vmax.f32 %v732, 0.0
      %v784 = vmax.f32 %v735, 0.0
      %v785 = vmax.f32 %v737, 0.0
      %v786 = vmax.f32 %v740, 0.0
      %v787 = vmax.f32 %v742, 0.0
      %v788 = vmax.f32 %v745, 0.0
      %v789 = vmax.f32 %v747, 0.0
      %v790 = vmax.f32 %v750, 0.0
      %v791 = vmax.f32 %v752, 0.0
      %v792 = vmax.f32 %v755, 0.0
      %v793 = vmax.f32 %v757, 0.0
      %v794 = vmax.f32 %v760, 0.0
      %v795 = vmax.f32 %v762, 0.0
      %v796 = vpack.c.bf16 %v765, %v764
      %v797 = vpack.c.bf16 %v767, %v766
      %v798 = vpack.c.bf16 %v769, %v768
      %v799 = vpack.c.bf16 %v771, %v770
      %v800 = vpack.c.bf16 %v773, %v772
      %v801 = vpack.c.bf16 %v775, %v774
      %v802 = vpack.c.bf16 %v777, %v776
      %v803 = vpack.c.bf16 %v779, %v778
      %v804 = vpack.c.bf16 %v781, %v780
      %v805 = vpack.c.bf16 %v783, %v782
      %v806 = vpack.c.bf16 %v785, %v784
      %v807 = vpack.c.bf16 %v787, %v786
      %v808 = vpack.c.bf16 %v789, %v788
      %v809 = vpack.c.bf16 %v791, %v790
      %v810 = vpack.c.bf16 %v793, %v792
      %v811 = vpack.c.bf16 %v795, %v794
      %v812 = vld [vmem:[%s5] sm:$0xf]
      %v813 = vld [vmem:[%s5 + $0x4] sm:$0xf]
      %v814 = vld [vmem:[%s5 + $0x8] sm:$0xf]
      %v815 = vld [vmem:[%s5 + $0xc] sm:$0xf]
      %v816 = vld [vmem:[%s5 + $0x10] sm:$0xf]
      %v817 = vld [vmem:[%s5 + $0x14] sm:$0xf]
      %v818 = vld [vmem:[%s5 + $0x18] sm:$0xf]
      %v819 = vld [vmem:[%s5 + $0x1c] sm:$0xf]
      %v820 = vld [vmem:[%s5 + $0x20] sm:$0xf]
      %v821 = vld [vmem:[%s5 + $0x24] sm:$0xf]
      %v822 = vld [vmem:[%s5 + $0x28] sm:$0xf]
      %v823 = vld [vmem:[%s5 + $0x2c] sm:$0xf]
      %v824 = vld [vmem:[%s5 + $0x30] sm:$0xf]
      %v825 = vld [vmem:[%s5 + $0x34] sm:$0xf]
      %v826 = vld [vmem:[%s5 + $0x38] sm:$0xf]
      %v827 = vld [vmem:[%s5 + $0x3c] sm:$0xf]
      %v828 = vld [vmem:[%s6] sm:$0x1]
      %v830 = vperm.slane %v828, 0
      %v848 = vunpack.c.l.b16 %v812
      %v849 = vunpack.c.l.b16 %v813
      %v850 = vunpack.c.l.b16 %v814
      %v851 = vunpack.c.l.b16 %v815
      %v852 = vunpack.c.l.b16 %v816
      %v853 = vunpack.c.l.b16 %v817
      %v854 = vunpack.c.l.b16 %v818
      %v855 = vunpack.c.l.b16 %v819
      %v856 = vunpack.c.l.b16 %v820
      %v857 = vunpack.c.l.b16 %v821
      %v858 = vunpack.c.l.b16 %v822
      %v859 = vunpack.c.l.b16 %v823
      %v860 = vunpack.c.l.b16 %v824
      %v861 = vunpack.c.l.b16 %v825
      %v862 = vunpack.c.l.b16 %v826
      %v863 = vunpack.c.l.b16 %v827
      %v864 = vpack.c.b16 %v849, %v848
      %v865 = vpack.c.b16 %v851, %v850
      %v866 = vpack.c.b16 %v853, %v852
      %v867 = vpack.c.b16 %v855, %v854
      %v868 = vpack.c.b16 %v857, %v856
      %v869 = vpack.c.b16 %v859, %v858
      %v870 = vpack.c.b16 %v861, %v860
      %v871 = vpack.c.b16 %v863, %v862
      %880 = vmatpush.bf16.msra.mxu0 %v871
      %881 = vmatpush.bf16.msra.mxu0 %v870
      %882 = vmatpush.bf16.msra.mxu0 %v869
      %883 = vmatpush.bf16.msra.mxu0 %v868
      %884 = vmatpush.bf16.msra.mxu0 %v867
      %885 = vmatpush.bf16.msra.mxu0 %v866
      %886 = vmatpush.bf16.msra.mxu0 %v865
      %887 = vmatpush.bf16.msra.mxu0 %v864
      %888 = vmatmul.bf16.gmra.mxu0 %v796
      %v889 = vpop.f32.mrf.mxu0
      %v890 = vadd.f32 %v830, %v889
      %v891 = vpop.f32.mrf.mxu0
      %v892 = vadd.f32 %v830, %v891
      %893 = vmatmul.bf16.gmra.mxu0 %v797
      %v894 = vpop.f32.mrf.mxu0
      %v895 = vadd.f32 %v830, %v894
      %v896 = vpop.f32.mrf.mxu0
      %v897 = vadd.f32 %v830, %v896
      %898 = vmatmul.bf16.gmra.mxu0 %v798
      %v899 = vpop.f32.mrf.mxu0
      %v900 = vadd.f32 %v830, %v899
      %v901 = vpop.f32.mrf.mxu0
      %v902 = vadd.f32 %v830, %v901
      %903 = vmatmul.bf16.gmra.mxu0 %v799
      %v904 = vpop.f32.mrf.mxu0
      %v905 = vadd.f32 %v830, %v904
      %v906 = vpop.f32.mrf.mxu0
      %v907 = vadd.f32 %v830, %v906
      %908 = vmatmul.bf16.gmra.mxu0 %v800
      %v909 = vpop.f32.mrf.mxu0
      %v910 = vadd.f32 %v830, %v909
      %v911 = vpop.f32.mrf.mxu0
      %v912 = vadd.f32 %v830, %v911
      %913 = vmatmul.bf16.gmra.mxu0 %v801
      %v914 = vpop.f32.mrf.mxu0
      %v915 = vadd.f32 %v830, %v914
      %v916 = vpop.f32.mrf.mxu0
      %v917 = vadd.f32 %v830, %v916
      %918 = vmatmul.bf16.gmra.mxu0 %v802
      %v919 = vpop.f32.mrf.mxu0
      %v920 = vadd.f32 %v830, %v919
      %v921 = vpop.f32.mrf.mxu0
      %v922 = vadd.f32 %v830, %v921
      %923 = vmatmul.bf16.gmra.mxu0 %v803
      %v924 = vpop.f32.mrf.mxu0
      %v925 = vadd.f32 %v830, %v924
      %v926 = vpop.f32.mrf.mxu0
      %v927 = vadd.f32 %v830, %v926
      %928 = vmatmul.bf16.gmra.mxu0 %v804
      %v929 = vpop.f32.mrf.mxu0
      %v930 = vadd.f32 %v830, %v929
      %v931 = vpop.f32.mrf.mxu0
      %v932 = vadd.f32 %v830, %v931
      %933 = vmatmul.bf16.gmra.mxu0 %v805
      %v934 = vpop.f32.mrf.mxu0
      %v935 = vadd.f32 %v830, %v934
      %v936 = vpop.f32.mrf.mxu0
      %v937 = vadd.f32 %v830, %v936
      %938 = vmatmul.bf16.gmra.mxu0 %v806
      %v939 = vpop.f32.mrf.mxu0
      %v940 = vadd.f32 %v830, %v939
      %v941 = vpop.f32.mrf.mxu0
      %v942 = vadd.f32 %v830, %v941
      %943 = vmatmul.bf16.gmra.mxu0 %v807
      %v944 = vpop.f32.mrf.mxu0
      %v945 = vadd.f32 %v830, %v944
      %v946 = vpop.f32.mrf.mxu0
      %v947 = vadd.f32 %v830, %v946
      %948 = vmatmul.bf16.gmra.mxu0 %v808
      %v949 = vpop.f32.mrf.mxu0
      %v950 = vadd.f32 %v830, %v949
      %v951 = vpop.f32.mrf.mxu0
      %v952 = vadd.f32 %v830, %v951
      %953 = vmatmul.bf16.gmra.mxu0 %v809
      %v954 = vpop.f32.mrf.mxu0
      %v955 = vadd.f32 %v830, %v954
      %v956 = vpop.f32.mrf.mxu0
      %v957 = vadd.f32 %v830, %v956
      %958 = vmatmul.bf16.gmra.mxu0 %v810
      %v959 = vpop.f32.mrf.mxu0
      %v960 = vadd.f32 %v830, %v959
      %v961 = vpop.f32.mrf.mxu0
      %v962 = vadd.f32 %v830, %v961
      %963 = vmatmul.bf16.gmra.mxu0 %v811
      %v964 = vpop.f32.mrf.mxu0
      %v965 = vadd.f32 %v830, %v964
      %v966 = vpop.f32.mrf.mxu0
      %v967 = vadd.f32 %v830, %v966
      %968 = vdwg.mxu0
      %v969 = vmax.f32 %v890, 0.0
      %v970 = vmax.f32 %v892, 0.0
      %v971 = vmax.f32 %v895, 0.0
      %v972 = vmax.f32 %v897, 0.0
      %v973 = vmax.f32 %v900, 0.0
      %v974 = vmax.f32 %v902, 0.0
      %v975 = vmax.f32 %v905, 0.0
      %v976 = vmax.f32 %v907, 0.0
      %v977 = vmax.f32 %v910, 0.0
      %v978 = vmax.f32 %v912, 0.0
      %v979 = vmax.f32 %v915, 0.0
      %v980 = vmax.f32 %v917, 0.0
      %v981 = vmax.f32 %v920, 0.0
      %v982 = vmax.f32 %v922, 0.0
      %v983 = vmax.f32 %v925, 0.0
      %v984 = vmax.f32 %v927, 0.0
      %v985 = vmax.f32 %v930, 0.0
      %v986 = vmax.f32 %v932, 0.0
      %v987 = vmax.f32 %v935, 0.0
      %v988 = vmax.f32 %v937, 0.0
      %v989 = vmax.f32 %v940, 0.0
      %v990 = vmax.f32 %v942, 0.0
      %v991 = vmax.f32 %v945, 0.0
      %v992 = vmax.f32 %v947, 0.0
      %v993 = vmax.f32 %v950, 0.0
      %v994 = vmax.f32 %v952, 0.0
      %v995 = vmax.f32 %v955, 0.0
      %v996 = vmax.f32 %v957, 0.0
      %v997 = vmax.f32 %v960, 0.0
      %v998 = vmax.f32 %v962, 0.0
      %v999 = vmax.f32 %v965, 0.0
      %v1000 = vmax.f32 %v967, 0.0
      %v1001 = vpack.c.bf16 %v970, %v969
      %v1002 = vpack.c.bf16 %v972, %v971
      %v1003 = vpack.c.bf16 %v974, %v973
      %v1004 = vpack.c.bf16 %v976, %v975
      %v1005 = vpack.c.bf16 %v978, %v977
      %v1006 = vpack.c.bf16 %v980, %v979
      %v1007 = vpack.c.bf16 %v982, %v981
      %v1008 = vpack.c.bf16 %v984, %v983
      %v1009 = vpack.c.bf16 %v986, %v985
      %v1010 = vpack.c.bf16 %v988, %v987
      %v1011 = vpack.c.bf16 %v990, %v989
      %v1012 = vpack.c.bf16 %v992, %v991
      %v1013 = vpack.c.bf16 %v994, %v993
      %v1014 = vpack.c.bf16 %v996, %v995
      %v1015 = vpack.c.bf16 %v998, %v997
      %v1016 = vpack.c.bf16 %v1000, %v999
      %v1017 = vld [vmem:[%s7] sm:$0xf]
      %v1018 = vld [vmem:[%s7 + $0x4] sm:$0xf]
      %v1019 = vld [vmem:[%s7 + $0x8] sm:$0xf]
      %v1020 = vld [vmem:[%s7 + $0xc] sm:$0xf]
      %v1021 = vld [vmem:[%s7 + $0x10] sm:$0xf]
      %v1022 = vld [vmem:[%s7 + $0x14] sm:$0xf]
      %v1023 = vld [vmem:[%s7 + $0x18] sm:$0xf]
      %v1024 = vld [vmem:[%s7 + $0x1c] sm:$0xf]
      %v1025 = vld [vmem:[%s7 + $0x20] sm:$0xf]
      %v1026 = vld [vmem:[%s7 + $0x24] sm:$0xf]
      %v1027 = vld [vmem:[%s7 + $0x28] sm:$0xf]
      %v1028 = vld [vmem:[%s7 + $0x2c] sm:$0xf]
      %v1029 = vld [vmem:[%s7 + $0x30] sm:$0xf]
      %v1030 = vld [vmem:[%s7 + $0x34] sm:$0xf]
      %v1031 = vld [vmem:[%s7 + $0x38] sm:$0xf]
      %v1032 = vld [vmem:[%s7 + $0x3c] sm:$0xf]
      %v1033 = vld [vmem:[%s8] sm:$0x1]
      %v1035 = vperm.slane %v1033, 0
      %v1053 = vunpack.c.l.b16 %v1017
      %v1054 = vunpack.c.l.b16 %v1018
      %v1055 = vunpack.c.l.b16 %v1019
      %v1056 = vunpack.c.l.b16 %v1020
      %v1057 = vunpack.c.l.b16 %v1021
      %v1058 = vunpack.c.l.b16 %v1022
      %v1059 = vunpack.c.l.b16 %v1023
      %v1060 = vunpack.c.l.b16 %v1024
      %v1061 = vunpack.c.l.b16 %v1025
      %v1062 = vunpack.c.l.b16 %v1026
      %v1063 = vunpack.c.l.b16 %v1027
      %v1064 = vunpack.c.l.b16 %v1028
      %v1065 = vunpack.c.l.b16 %v1029
      %v1066 = vunpack.c.l.b16 %v1030
      %v1067 = vunpack.c.l.b16 %v1031
      %v1068 = vunpack.c.l.b16 %v1032
      %v1069 = vpack.c.b16 %v1054, %v1053
      %v1070 = vpack.c.b16 %v1056, %v1055
      %v1071 = vpack.c.b16 %v1058, %v1057
      %v1072 = vpack.c.b16 %v1060, %v1059
      %v1073 = vpack.c.b16 %v1062, %v1061
      %v1074 = vpack.c.b16 %v1064, %v1063
      %v1075 = vpack.c.b16 %v1066, %v1065
      %v1076 = vpack.c.b16 %v1068, %v1067
      %1085 = vmatpush.bf16.msra.mxu0 %v1076
      %1086 = vmatpush.bf16.msra.mxu0 %v1075
      %1087 = vmatpush.bf16.msra.mxu0 %v1074
      %1088 = vmatpush.bf16.msra.mxu0 %v1073
      %1089 = vmatpush.bf16.msra.mxu0 %v1072
      %1090 = vmatpush.bf16.msra.mxu0 %v1071
      %1091 = vmatpush.bf16.msra.mxu0 %v1070
      %1092 = vmatpush.bf16.msra.mxu0 %v1069
      %1093 = vmatmul.bf16.gmra.mxu0 %v1001
      %v1094 = vpop.f32.mrf.mxu0
      %v1095 = vadd.f32 %v1035, %v1094
      %v1096 = vpop.f32.mrf.mxu0
      %v1097 = vadd.f32 %v1035, %v1096
      %1098 = vmatmul.bf16.gmra.mxu0 %v1002
      %v1099 = vpop.f32.mrf.mxu0
      %v1100 = vadd.f32 %v1035, %v1099
      %v1101 = vpop.f32.mrf.mxu0
      %v1102 = vadd.f32 %v1035, %v1101
      %1103 = vmatmul.bf16.gmra.mxu0 %v1003
      %v1104 = vpop.f32.mrf.mxu0
      %v1105 = vadd.f32 %v1035, %v1104
      %v1106 = vpop.f32.mrf.mxu0
      %v1107 = vadd.f32 %v1035, %v1106
      %1108 = vmatmul.bf16.gmra.mxu0 %v1004
      %v1109 = vpop.f32.mrf.mxu0
      %v1110 = vadd.f32 %v1035, %v1109
      %v1111 = vpop.f32.mrf.mxu0
      %v1112 = vadd.f32 %v1035, %v1111
      %1113 = vmatmul.bf16.gmra.mxu0 %v1005
      %v1114 = vpop.f32.mrf.mxu0
      %v1115 = vadd.f32 %v1035, %v1114
      %v1116 = vpop.f32.mrf.mxu0
      %v1117 = vadd.f32 %v1035, %v1116
      %1118 = vmatmul.bf16.gmra.mxu0 %v1006
      %v1119 = vpop.f32.mrf.mxu0
      %v1120 = vadd.f32 %v1035, %v1119
      %v1121 = vpop.f32.mrf.mxu0
      %v1122 = vadd.f32 %v1035, %v1121
      %1123 = vmatmul.bf16.gmra.mxu0 %v1007
      %v1124 = vpop.f32.mrf.mxu0
      %v1125 = vadd.f32 %v1035, %v1124
      %v1126 = vpop.f32.mrf.mxu0
      %v1127 = vadd.f32 %v1035, %v1126
      %1128 = vmatmul.bf16.gmra.mxu0 %v1008
      %v1129 = vpop.f32.mrf.mxu0
      %v1130 = vadd.f32 %v1035, %v1129
      %v1131 = vpop.f32.mrf.mxu0
      %v1132 = vadd.f32 %v1035, %v1131
      %1133 = vmatmul.bf16.gmra.mxu0 %v1009
      %v1134 = vpop.f32.mrf.mxu0
      %v1135 = vadd.f32 %v1035, %v1134
      %v1136 = vpop.f32.mrf.mxu0
      %v1137 = vadd.f32 %v1035, %v1136
      %1138 = vmatmul.bf16.gmra.mxu0 %v1010
      %v1139 = vpop.f32.mrf.mxu0
      %v1140 = vadd.f32 %v1035, %v1139
      %v1141 = vpop.f32.mrf.mxu0
      %v1142 = vadd.f32 %v1035, %v1141
      %1143 = vmatmul.bf16.gmra.mxu0 %v1011
      %v1144 = vpop.f32.mrf.mxu0
      %v1145 = vadd.f32 %v1035, %v1144
      %v1146 = vpop.f32.mrf.mxu0
      %v1147 = vadd.f32 %v1035, %v1146
      %1148 = vmatmul.bf16.gmra.mxu0 %v1012
      %v1149 = vpop.f32.mrf.mxu0
      %v1150 = vadd.f32 %v1035, %v1149
      %v1151 = vpop.f32.mrf.mxu0
      %v1152 = vadd.f32 %v1035, %v1151
      %1153 = vmatmul.bf16.gmra.mxu0 %v1013
      %v1154 = vpop.f32.mrf.mxu0
      %v1155 = vadd.f32 %v1035, %v1154
      %v1156 = vpop.f32.mrf.mxu0
      %v1157 = vadd.f32 %v1035, %v1156
      %1158 = vmatmul.bf16.gmra.mxu0 %v1014
      %v1159 = vpop.f32.mrf.mxu0
      %v1160 = vadd.f32 %v1035, %v1159
      %v1161 = vpop.f32.mrf.mxu0
      %v1162 = vadd.f32 %v1035, %v1161
      %1163 = vmatmul.bf16.gmra.mxu0 %v1015
      %v1164 = vpop.f32.mrf.mxu0
      %v1165 = vadd.f32 %v1035, %v1164
      %v1166 = vpop.f32.mrf.mxu0
      %v1167 = vadd.f32 %v1035, %v1166
      %1168 = vmatmul.bf16.gmra.mxu0 %v1016
      %v1169 = vpop.f32.mrf.mxu0
      %v1170 = vadd.f32 %v1035, %v1169
      %v1171 = vpop.f32.mrf.mxu0
      %v1172 = vadd.f32 %v1035, %v1171
      %1173 = vdwg.mxu0
      %vm1174 = vcmask 261120
      %1175 = vst.msk [vmem:[%s334] sm:$0xff] %vm1174, %v1095
      %1176 = vst.msk [vmem:[%s334 + $0x8] sm:$0xff] %vm1174, %v1097
      %1177 = vst.msk [vmem:[%s334 + $0x10] sm:$0xff] %vm1174, %v1100
      %1178 = vst.msk [vmem:[%s334 + $0x18] sm:$0xff] %vm1174, %v1102
      %1179 = vst.msk [vmem:[%s334 + $0x20] sm:$0xff] %vm1174, %v1105
      %1180 = vst.msk [vmem:[%s334 + $0x28] sm:$0xff] %vm1174, %v1107
      %1181 = vst.msk [vmem:[%s334 + $0x30] sm:$0xff] %vm1174, %v1110
      %1182 = vst.msk [vmem:[%s334 + $0x38] sm:$0xff] %vm1174, %v1112
      %1183 = vst.msk [vmem:[%s334 + $0x40] sm:$0xff] %vm1174, %v1115
      %1184 = vst.msk [vmem:[%s334 + $0x48] sm:$0xff] %vm1174, %v1117
      %1185 = vst.msk [vmem:[%s334 + $0x50] sm:$0xff] %vm1174, %v1120
      %1186 = vst.msk [vmem:[%s334 + $0x58] sm:$0xff] %vm1174, %v1122
      %1187 = vst.msk [vmem:[%s334 + $0x60] sm:$0xff] %vm1174, %v1125
      %1188 = vst.msk [vmem:[%s334 + $0x68] sm:$0xff] %vm1174, %v1127
      %1189 = vst.msk [vmem:[%s334 + $0x70] sm:$0xff] %vm1174, %v1130
      %1190 = vst.msk [vmem:[%s334 + $0x78] sm:$0xff] %vm1174, %v1132
      %1191 = vst.msk [vmem:[%s334 + $0x80] sm:$0xff] %vm1174, %v1135
      %1192 = vst.msk [vmem:[%s334 + $0x88] sm:$0xff] %vm1174, %v1137
      %1193 = vst.msk [vmem:[%s334 + $0x90] sm:$0xff] %vm1174, %v1140
      %1194 = vst.msk [vmem:[%s334 + $0x98] sm:$0xff] %vm1174, %v1142
      %1195 = vst.msk [vmem:[%s334 + $0xa0] sm:$0xff] %vm1174, %v1145
      %1196 = vst.msk [vmem:[%s334 + $0xa8] sm:$0xff] %vm1174, %v1147
      %1197 = vst.msk [vmem:[%s334 + $0xb0] sm:$0xff] %vm1174, %v1150
      %1198 = vst.msk [vmem:[%s334 + $0xb8] sm:$0xff] %vm1174, %v1152
      %1199 = vst.msk [vmem:[%s334 + $0xc0] sm:$0xff] %vm1174, %v1155
      %1200 = vst.msk [vmem:[%s334 + $0xc8] sm:$0xff] %vm1174, %v1157
      %1201 = vst.msk [vmem:[%s334 + $0xd0] sm:$0xff] %vm1174, %v1160
      %1202 = vst.msk [vmem:[%s334 + $0xd8] sm:$0xff] %vm1174, %v1162
      %1203 = vst.msk [vmem:[%s334 + $0xe0] sm:$0xff] %vm1174, %v1165
      %1204 = vst.msk [vmem:[%s334 + $0xe8] sm:$0xff] %vm1174, %v1167
      %1205 = vst.msk [vmem:[%s334 + $0xf0] sm:$0xff] %vm1174, %v1170
      %1206 = vst.msk [vmem:[%s334 + $0xf8] sm:$0xff] %vm1174, %v1172
      %s1207 = smul.u32 32, %s20
      %p1208 = scmp.lt.s32.totalorder %s1207, 63
      %s1209 = scalar_select %p1208, %s1207, 63
      %s1210 = smul.addr %s1209, 8
      %s1211 = scalar_lea.vmem %s9, %s1210
      // Predicated region
      $region57: #{mlp_forward.1} parent=55 // pred_check
        %p1212 = pneg %p232
      $region58: #{mlp_forward.1} parent=55 // pred_check_branch
        %1214 = sbr.rel (%p1212) target = $region60
      $region59: #{mlp_forward.1} parent=55 // pred_region
        %s1215 = smul.u32 32, %s20
      $region60: #{mlp_forward.1} parent=55 // pred_fallthru
        _
    $region56: #{mlp_forward.1} parent=5 // pred_fallthru
      _
    %p1216 = scmp.le.s32.totalorder 2, %s15
    // Predicated region
    $region61: #{mlp_forward.1} parent=5 // pred_check
      %p1217 = pneg %p1216
    $region62: #{mlp_forward.1} parent=5 // pred_check_branch
      %1219 = sbr.rel (%p1217) target = $region64
    $region63: #{mlp_forward.1} parent=5 // pred_region
      %s1220 = ssub.s32 %s15, 2
      // Predicated region
      $region65: #{mlp_forward.1} parent=63 // pred_check
        %p1221 = pneg %p238
      $region66: #{mlp_forward.1} parent=63 // pred_check_branch
        %1223 = sbr.rel (%p1221) target = $region68
      $region67: #{mlp_forward.1} parent=63 // pred_region
        %s1224 = smul.u32 32, %s21
        %p1225 = scmp.lt.s32.totalorder %s1224, 63
        %s1226 = scalar_select %p1225, %s1224, 63
        %s1227 = smul.addr %s1226, 8
        %s1228 = scalar_lea.vmem %s9, %s1227
      $region68: #{mlp_forward.1} parent=63 // pred_fallthru
        _
    $region64: #{mlp_forward.1} parent=5 // pred_fallthru
      _
  $region6: #{mlp_forward.1} parent=0 // loop_footer
    %s19 = sadd.s32 1, %s15
  $region7: #{mlp_forward.1} parent=0 // loop_footer_branch
    %14 = sbr.rel target = $region3
  $region8: #{mlp_forward.1} parent=0 // loop_exit
    _

</llo_original>
